<compile_context>
chip_gen: v6e
topology: v6e:2x2x1
jax: 0.10.0
libtpu: 0.0.40
codegen_flags: <defaults>
</compile_context>

<pallas_src>
import jax
import jax.numpy as jnp
from jax.experimental import pallas as pl
from jax.experimental.pallas import tpu as pltpu


def _identity_dma_kernel(x_ref, o_ref, sem):
    # Single whole-array HBM->HBM DMA; no VMEM staging, no grid.
    cp = pltpu.make_async_copy(x_ref, o_ref, sem)
    cp.start()
    cp.wait()


def _identity_copy_pallas(x):
    """One-shot HBM->HBM DMA copy of `x` via Pallas (bandwidth-bound)."""
    if x.size == 0:
        return x
    return pl.pallas_call(
        _identity_dma_kernel,
        out_shape=jax.ShapeDtypeStruct(x.shape, x.dtype),
        in_specs=[pl.BlockSpec(memory_space=pl.ANY)],
        out_specs=pl.BlockSpec(memory_space=pl.ANY),
        scratch_shapes=[pltpu.SemaphoreType.DMA(())],
    )(x)


def dummy_layer_norm(x, normalized_shape=None, eps=1e-5, *, force_kernel=False):
    """Pallas implementation of DummyLayerNorm.forward: returns x unchanged.

    `normalized_shape` / `eps` are accepted for API parity but unused,
    matching the PyTorch module (no parameters, no computation).

    Default path returns x directly (zero HBM traffic).  `force_kernel=True`
    routes through a single HBM->HBM DMA Pallas kernel for framework parity /
    testing purposes only.
    """
    if not force_kernel:
        # Identity op: the best "kernel" is no kernel at all.
        return x
    return _identity_copy_pallas(x)


if __name__ == "__main__":
    key = jax.random.PRNGKey(0)
    # Small GPT-style activation: batch=2, seq=8, hidden=32.
    x = jax.random.normal(key, (2, 8, 32), dtype=jnp.float32)

    # Production path: pure pass-through.
    y_fast = dummy_layer_norm(x, normalized_shape=32, eps=1e-5)

    # Kernel path: exercised once to validate the Pallas DMA copy.
    y_kernel = dummy_layer_norm(x, normalized_shape=32, eps=1e-5,
                                force_kernel=True)
    y_kernel = jax.block_until_ready(y_kernel)

    assert y_fast.shape == x.shape and y_fast.dtype == x.dtype
    assert y_kernel.shape == x.shape and y_kernel.dtype == x.dtype
    assert bool(jnp.array_equal(y_fast, x))
    assert bool(jnp.array_equal(y_kernel, x))
    print("KERNEL_OK")
</pallas_src>

<mosaic_0001>
module attributes {stable_mosaic.version = 11 : i64} {
  func.func @_identity_dma_kernel(%arg0: memref<2x8x32xf32, #tpu.memory_space<any>>, %arg1: memref<2x8x32xf32, #tpu.memory_space<any>>, %arg2: memref<!tpu.dma_semaphore, #tpu.memory_space<semaphore_mem>>) attributes {dimension_semantics = [], scalar_prefetch = 0 : i64, scratch_operands = 1 : i64, tpu.core_type = #tpu.core_type<tc>} {
    tpu.enqueue_dma source(%arg0 : memref<2x8x32xf32, #tpu.memory_space<any>>) target(%arg1 : memref<2x8x32xf32, #tpu.memory_space<any>>) target_semaphore(%arg2 : memref<!tpu.dma_semaphore, #tpu.memory_space<semaphore_mem>>)
    tpu.wait_dma2 semaphore(%arg2 : memref<!tpu.dma_semaphore, #tpu.memory_space<semaphore_mem>>) src(%arg0 : memref<2x8x32xf32, #tpu.memory_space<any>>) dst(%arg1 : memref<2x8x32xf32, #tpu.memory_space<any>>)
    return
  }
}

</mosaic_0001>

<llo_original>
// kernel: tpu_custom_call.1
$region0: #{tpu_custom_call.1}
  #allocation0 [shape = 'u32[]', space=smem, size = 0x4, offset = 0x4, fixed_abs, tag = 'smem constant byte address 0x4 - core index']
  #allocation1 [shape = 'u32[144,128]{1,0:T(1,128)}', space=vmem, size = 0x12000, scoped, tag = 'internal scratch']
  #allocation2 [shape = 's32[1]{0}', space=sflag, size = 0x4, scoped, tag = 'scratch operand']
  #allocation3 [shape = 's32[]', space=sflag, size = 0x4, offset = 0, fixed_abs, tag = 'sflag constant byte address 0x0 - dummy sync flag']
  #allocation4 [shape = 'u32[0]{0}', space=smem, size = 0, offset = 0, fixed_abs, tag = 'smem constant byte address 0x0 - null']
  %s0 = inlined_call_operand.hbm [shape: f32[2,8,32], index: 0, kind: input, shape index: {}]
  %s1 = inlined_call_operand.hbm [shape: f32[2,8,32], index: 1, kind: output, shape index: {}]
  %s2 = sld [smem:[#allocation0]]
  $region2: #{tpu_custom_call.1} parent=0
    _
  %s4 = ssub.s32 1, %s2
  %s5 = scalar_select 0, %s4, %s2
  %s7 = sshll.u32 1, 14
  %s8 = sxor.u32 4294967295, %s7
  %12 = dma.general %s0, 256, %s1, [#allocation2], 131072, [#allocation4], 0, 0
  %s13 = smul.u32 2, 8
  %s14 = smul.u32 %s13, 1
  %s15 = sshll.u32 %s14, 4
  %16 = dma.done [#allocation2], %s15
  %17 = vsyncmov [#allocation2]
  %s18 = vpop.sfrf %17
  %p19 = scmp.eq.s32.totalorder %s18, 0
  %p20 = pneg %p19
  %22 = shalt.err (%p20)

</llo_original>
